<compile_context>
chip_gen: v7x
topology: tpu7x:2x2x1
jax: 0.10.0
libtpu: 0.0.40
codegen_flags: <defaults>
</compile_context>

<pallas_src>
import jax
import jax.numpy as jnp
from jax import lax
from jax.experimental import pallas as pl
from jax.experimental.pallas import tpu as pltpu


def _make_pad_kv_kernel(max_kv_len: int, s_in: int, nb: int, hb: int):
    """One grid step = (n-block, sequence b, head-block h).

    Manual windowed DMA: only the max_kv_len rows that can reach the output are
    read from HBM ([L - q, L), q = min(L, max_kv_len)).  They land in the second
    half of a (2*max_kv_len)-row VMEM buffer; the first half is never written.
    Output rows that would fall in the first half are exactly the left-pad
    region and are zeroed by a mask, so no scratch initialization (and no
    cross-step scratch state) is needed.
    """

    def kernel(lens_ref, kv_ref, out_ref, buf, sem):
        n_blk = pl.program_id(0)
        b = pl.program_id(1)
        h = pl.program_id(2)
        n_h_blocks = pl.num_programs(2)

        # Clamp: a length outside [0, S_in] would otherwise drive the HBM DMA
        # out of bounds (DMA OOB is a runtime error).
        L = jnp.minimum(jnp.maximum(lens_ref[b], 0), s_in)
        q = jnp.minimum(L, max_kv_len)   # rows actually kept from this sequence
        pad = max_kv_len - q             # leading zero rows in the output
        start = L - q                    # first HBM row of the read window
        # Window [start, start + max_kv_len) always fits inside [0, S_in]:
        # start + max_kv_len = L + (max_kv_len - q) <= max(L, max_kv_len) <= S_in.

        def dma(hblk, slot):
            src = kv_ref.at[pl.ds(n_blk * nb, nb), b, pl.ds(hblk * hb, hb),
                            pl.ds(start, max_kv_len), :]
            dst = buf.at[slot, :, :, pl.ds(max_kv_len, max_kv_len), :]
            return pltpu.make_async_copy(src, dst, sem.at[slot])

        slot = h % 2

        # Prime the chain at the first head-block of every (n-block, b): each
        # (n, b) chain is self-contained, so marking N / B "parallel" is safe.
        @pl.when(h == 0)
        def _():
            dma(0, 0).start()

        # Prefetch the next head-block while this one is consumed.
        @pl.when(h + 1 < n_h_blocks)
        def _():
            dma(h + 1, 1 - slot).start()

        dma(h, slot).wait()

        # out[p] = buf[q + p]:
        #   q + p <  max_kv_len -> first (never-written) half -> masked to zero
        #   q + p >= max_kv_len -> window row (q + p - max_kv_len)
        #                         = kv[L - max_kv_len + p]   (copy / left-trunc)
        window = buf[slot, :, :, pl.ds(q, max_kv_len), :]   # (nb, hb, max_kv_len, D)
        seq_pos = lax.broadcasted_iota(jnp.int32, window.shape, 2)
        out_ref[:, 0, :, :, :] = jnp.where(seq_pos >= pad, window,
                                           jnp.zeros_like(window))

    return kernel


def _vmem_capacity_bytes() -> int:
    """Generation-aware VMEM capacity (64 MiB v7x, 128 MiB v5e/v6e)."""
    try:
        cap = int(pltpu.get_tpu_info().vmem_capacity_bytes)
        if cap > 0:
            return cap
    except Exception:
        pass
    return 64 * 1024 * 1024   # v7x-safe fallback


def _pick_blocks(n_total, n_heads, max_kv_len, d, itemsize, budget_bytes):
    """Choose (nb, hb) block sizes against a VMEM budget.

    Per (n, head) footprint of one block unit:
      2 slots x (2*max_kv_len) rows  -> input landing buffer (double-buffered)
      2       x   max_kv_len   rows -> auto-pipelined output block
     ~2       x   max_kv_len   rows -> dynamic-slice / select temporaries
    """
    per_unit = 8 * max_kv_len * d * itemsize
    hb = 1
    for cand in range(1, n_heads + 1):
        if n_heads % cand == 0 and cand * per_unit <= budget_bytes:
            hb = cand
    nb = 1
    if hb == n_heads:
        per_n = n_heads * per_unit
        for cand in range(1, n_total + 1):
            if n_total % cand == 0 and cand * per_n <= budget_bytes:
                nb = cand
    return nb, hb, nb * hb * per_unit


def pad_kv_cache_pallas(kv_stacked: jax.Array, lens, max_kv_len: int) -> jax.Array:
    """kv_stacked: [N, B, H, S_in, D] (rows >= lens[b] along seq are don't-care).
    lens: [B] integer lengths.  Returns [N, B, H, max_kv_len, D] with
    _pad_kv_cache_view semantics applied per (n, b)."""
    N, B, H, S_in, D = kv_stacked.shape
    dtype = kv_stacked.dtype
    if max_kv_len == 0:
        return jnp.zeros((N, B, H, 0, D), dtype)
    if max_kv_len > S_in:
        raise ValueError("max_kv_len must be <= the staged kv seq capacity S_in")
    lens = jnp.asarray(lens, dtype=jnp.int32)
    itemsize = jnp.dtype(dtype).itemsize

    capacity = _vmem_capacity_bytes()
    budget = int(capacity * 0.65)           # ~41 MiB on v7x, ~83 MiB on v5e/v6e
    nb, hb, needed = _pick_blocks(N, H, max_kv_len, D, itemsize, budget)
    vmem_limit = int(min(needed + (8 << 20), int(capacity * 0.9)))
    vmem_limit = int(max(vmem_limit, needed + (1 << 20), 16 << 20))

    kernel = _make_pad_kv_kernel(max_kv_len, S_in, nb, hb)

    grid_spec = pltpu.PrefetchScalarGridSpec(
        num_scalar_prefetch=1,
        grid=(N // nb, B, H // hb),
        # kv stays in HBM; the kernel issues the (lens-dependent) windowed DMAs.
        in_specs=[pl.BlockSpec(memory_space=pl.ANY)],
        out_specs=pl.BlockSpec((nb, 1, hb, max_kv_len, D),
                               lambda n, b, h, lens_ref: (n, b, h, 0, 0)),
        scratch_shapes=[
            pltpu.VMEM((2, nb, hb, 2 * max_kv_len, D), dtype),
            pltpu.SemaphoreType.DMA((2,)),
        ],
    )

    # Pure copy kernel: read max_kv_len rows per (n, b, head), write the same.
    bytes_accessed = 2 * N * B * H * max_kv_len * D * itemsize + B * 4

    return pl.pallas_call(
        kernel,
        out_shape=jax.ShapeDtypeStruct((N, B, H, max_kv_len, D), dtype),
        grid_spec=grid_spec,
        compiler_params=pltpu.CompilerParams(
            dimension_semantics=("parallel", "parallel", "arbitrary"),
            vmem_limit_bytes=vmem_limit,
        ),
        cost_estimate=pl.CostEstimate(flops=0, transcendentals=0,
                                      bytes_accessed=bytes_accessed),
    )(lens, kv_stacked)


def prepare_kv_cache(kv_cache_stacked: jax.Array, seq_lens, max_seq_limit: int):
    """Mirror of BigDLModelForCausalLM.prepare_kv_cache's tensor path.

    kv_cache_stacked: [num_layers, kv_cache_size_1, B, H, S_in, D] -- the
        per-sequence KV entries for the current batch, kept as one stacked array
        so a single pallas_call covers every layer and both k/v.
    seq_lens: host-side list of python ints (per-sequence current lengths).
    Returns (nested list [[k, v] per layer] of [B, H, max_kv_len, D] arrays,
             max_kv_len).
    """
    num_layers, kv_size_1, B, H, S_in, D = kv_cache_stacked.shape
    max_kv_len = int(min(max(int(l) for l in seq_lens), max_seq_limit))
    lens = jnp.asarray([int(l) for l in seq_lens], dtype=jnp.int32)

    kv_flat = kv_cache_stacked.reshape(num_layers * kv_size_1, B, H, S_in, D)
    out_flat = pad_kv_cache_pallas(kv_flat, lens, max_kv_len)
    out = out_flat.reshape(num_layers, kv_size_1, B, H, max_kv_len, D)
    nested = [[out[i, j] for j in range(kv_size_1)] for i in range(num_layers)]
    return nested, max_kv_len


def _reference_pad(kv, seq_lens, max_kv_len):
    """Pure-JAX reference of _pad_kv_cache_view + cat(dim=0) for one [B,H,S,D] tensor."""
    B, H, S_in, D = kv.shape
    outs = []
    for b in range(B):
        L = min(max(int(seq_lens[b]), 0), S_in)
        t = kv[b, :, :L, :]
        if L < max_kv_len:
            z = jnp.zeros((H, max_kv_len - L, D), kv.dtype)
            t = jnp.concatenate([z, t], axis=1)
        elif L > max_kv_len:
            t = t[:, L - max_kv_len:, :]
        outs.append(t[None])
    return jnp.concatenate(outs, axis=0)


if __name__ == "__main__":
    key = jax.random.PRNGKey(0)

    # Small shapes: 2 layers x (k, v), batch=2, heads=4, head_dim=128 (lane-dense),
    # staged seq capacity 16, max_model_len 8.
    num_layers, kv_cache_size_1 = 2, 2
    B, H, D = 2, 4, 128
    S_in = 16
    max_seq_limit = 8
    seq_lens = [5, 12]          # one left-pad case, one left-truncate case

    key, sub = jax.random.split(key)
    kv_cache = jax.random.normal(
        sub, (num_layers, kv_cache_size_1, B, H, S_in, D), dtype=jnp.float32)

    bigdl_kv_cache, max_kv_len = prepare_kv_cache(kv_cache, seq_lens, max_seq_limit)
    jax.block_until_ready(bigdl_kv_cache)

    ok = True
    for i in range(num_layers):
        for j in range(kv_cache_size_1):
            ref = _reference_pad(kv_cache[i, j], seq_lens, max_kv_len)
            got = bigdl_kv_cache[i][j]
            if got.shape != (B, H, max_kv_len, D):
                ok = False
            elif not bool(jnp.array_equal(got, ref)):
                ok = False

    print("KERNEL_OK" if ok else "KERNEL_MISMATCH")
</pallas_src>

<mosaic_0001>
module attributes {stable_mosaic.version = 11 : i64} {
  func.func @kernel(%arg0: i32, %arg1: i32, %arg2: i32, %arg3: memref<2xi32, #tpu.memory_space<smem>>, %arg4: memref<4x2x4x16x128xf32, #tpu.memory_space<any>>, %arg5: memref<4x1x4x8x128xf32, #tpu.memory_space<vmem>>, %arg6: memref<2x4x4x16x128xf32, #tpu.memory_space<vmem>>, %arg7: memref<2x!tpu.dma_semaphore, #tpu.memory_space<semaphore_mem>>) attributes {dimension_semantics = [#tpu.dimension_semantics<parallel>, #tpu.dimension_semantics<parallel>, #tpu.dimension_semantics<arbitrary>], iteration_bounds = array<i64: 1, 2, 1>, scalar_prefetch = 1 : i64, scratch_operands = 2 : i64, tpu.core_type = #tpu.core_type<tc>, window_params = [{}, {transform_indices = @transform_1, window_bounds = array<i64: 4, 1, 4, 8, 128>}]} {
    %0 = arith.index_cast %arg1 : i32 to index
    %1 = memref.load %arg3[%0] : memref<2xi32, #tpu.memory_space<smem>>
    %c0_i32 = arith.constant 0 : i32
    %2 = arith.maxsi %1, %c0_i32 : i32
    %c16_i32 = arith.constant 16 : i32
    %3 = arith.minsi %2, %c16_i32 : i32
    %c8_i32 = arith.constant 8 : i32
    %4 = arith.minsi %3, %c8_i32 : i32
    %c8_i32_0 = arith.constant 8 : i32
    %5 = arith.subi %c8_i32_0, %4 : i32
    %6 = arith.subi %3, %4 : i32
    %c2_i32 = arith.constant 2 : i32
    %c0_i32_1 = arith.constant 0 : i32
    %7 = arith.cmpi eq, %c2_i32, %c0_i32_1 : i32
    %c1_i32 = arith.constant 1 : i32
    %8 = arith.select %7, %c1_i32, %c2_i32 : i32
    %9 = arith.remsi %arg2, %8 : i32
    %c0_i32_2 = arith.constant 0 : i32
    %10 = arith.cmpi ne, %9, %c0_i32_2 : i32
    %c0_i32_3 = arith.constant 0 : i32
    %11 = arith.cmpi slt, %9, %c0_i32_3 : i32
    %c0_i32_4 = arith.constant 0 : i32
    %12 = arith.cmpi slt, %8, %c0_i32_4 : i32
    %13 = arith.xori %11, %12 : i1
    %14 = arith.andi %13, %10 : i1
    %15 = arith.addi %9, %8 : i32
    %16 = arith.select %14, %15, %9 : i32
    %c0_i32_5 = arith.constant 0 : i32
    %17 = arith.cmpi eq, %arg2, %c0_i32_5 : i32
    %18 = arith.extui %17 : i1 to i32
    %c0_i32_6 = arith.constant 0 : i32
    %19 = arith.cmpi ne, %18, %c0_i32_6 : i32
    scf.if %19 {
      %c4_i32_23 = arith.constant 4 : i32
      %44 = arith.muli %arg0, %c4_i32_23 : i32
      %c0_i32_24 = arith.constant 0 : i32
      %c0_i32_25 = arith.constant 0 : i32
      %c0_i32_26 = arith.constant 0 : i32
      %c0_i32_27 = arith.constant 0 : i32
      %45 = tpu.memref_slice %arg4[%44, %arg1, %c0_i32_26, %6, %c0_i32_27] : memref<4x2x4x16x128xf32, #tpu.memory_space<any>> -> memref<4x1x4x8x128xf32, #tpu.memory_space<any>>
      %46 = tpu.memref_squeeze %45 : memref<4x1x4x8x128xf32, #tpu.memory_space<any>> -> memref<4x4x8x128xf32, #tpu.memory_space<any>>
      %c0_i32_28 = arith.constant 0 : i32
      %c0_i32_29 = arith.constant 0 : i32
      %c8_i32_30 = arith.constant 8 : i32
      %c0_i32_31 = arith.constant 0 : i32
      %47 = tpu.memref_slice %arg6[%c0_i32_24, %c0_i32_28, %c0_i32_29, %c8_i32_30, %c0_i32_31] : memref<2x4x4x16x128xf32, #tpu.memory_space<vmem>> -> memref<1x4x4x8x128xf32, #tpu.memory_space<vmem>>
      %48 = tpu.memref_squeeze %47 : memref<1x4x4x8x128xf32, #tpu.memory_space<vmem>> -> memref<4x4x8x128xf32, #tpu.memory_space<vmem>>
      %49 = tpu.memref_slice %arg7[%c0_i32_25] : memref<2x!tpu.dma_semaphore, #tpu.memory_space<semaphore_mem>> -> memref<1x!tpu.dma_semaphore, #tpu.memory_space<semaphore_mem>>
      %50 = tpu.memref_squeeze %49 : memref<1x!tpu.dma_semaphore, #tpu.memory_space<semaphore_mem>> -> memref<!tpu.dma_semaphore, #tpu.memory_space<semaphore_mem>>
      tpu.enqueue_dma source(%46 : memref<4x4x8x128xf32, #tpu.memory_space<any>>) target(%48 : memref<4x4x8x128xf32, #tpu.memory_space<vmem>>) target_semaphore(%50 : memref<!tpu.dma_semaphore, #tpu.memory_space<semaphore_mem>>)
    } else {
    }
    %c1_i32_7 = arith.constant 1 : i32
    %20 = arith.addi %arg2, %c1_i32_7 : i32
    %c1_i32_8 = arith.constant 1 : i32
    %21 = arith.cmpi slt, %20, %c1_i32_8 : i32
    %22 = arith.extui %21 : i1 to i32
    %c0_i32_9 = arith.constant 0 : i32
    %23 = arith.cmpi ne, %22, %c0_i32_9 : i32
    scf.if %23 {
      %c1_i32_23 = arith.constant 1 : i32
      %44 = arith.addi %arg2, %c1_i32_23 : i32
      %c1_i32_24 = arith.constant 1 : i32
      %45 = arith.subi %c1_i32_24, %16 : i32
      %c4_i32_25 = arith.constant 4 : i32
      %46 = arith.muli %arg0, %c4_i32_25 : i32
      %c4_i32_26 = arith.constant 4 : i32
      %47 = arith.muli %44, %c4_i32_26 : i32
      %c0_i32_27 = arith.constant 0 : i32
      %48 = tpu.memref_slice %arg4[%46, %arg1, %47, %6, %c0_i32_27] : memref<4x2x4x16x128xf32, #tpu.memory_space<any>> -> memref<4x1x4x8x128xf32, #tpu.memory_space<any>>
      %49 = tpu.memref_squeeze %48 : memref<4x1x4x8x128xf32, #tpu.memory_space<any>> -> memref<4x4x8x128xf32, #tpu.memory_space<any>>
      %c0_i32_28 = arith.constant 0 : i32
      %c0_i32_29 = arith.constant 0 : i32
      %c8_i32_30 = arith.constant 8 : i32
      %c0_i32_31 = arith.constant 0 : i32
      %50 = tpu.memref_slice %arg6[%45, %c0_i32_28, %c0_i32_29, %c8_i32_30, %c0_i32_31] : memref<2x4x4x16x128xf32, #tpu.memory_space<vmem>> -> memref<1x4x4x8x128xf32, #tpu.memory_space<vmem>>
      %51 = tpu.memref_squeeze %50 : memref<1x4x4x8x128xf32, #tpu.memory_space<vmem>> -> memref<4x4x8x128xf32, #tpu.memory_space<vmem>>
      %52 = tpu.memref_slice %arg7[%45] : memref<2x!tpu.dma_semaphore, #tpu.memory_space<semaphore_mem>> -> memref<1x!tpu.dma_semaphore, #tpu.memory_space<semaphore_mem>>
      %53 = tpu.memref_squeeze %52 : memref<1x!tpu.dma_semaphore, #tpu.memory_space<semaphore_mem>> -> memref<!tpu.dma_semaphore, #tpu.memory_space<semaphore_mem>>
      tpu.enqueue_dma source(%49 : memref<4x4x8x128xf32, #tpu.memory_space<any>>) target(%51 : memref<4x4x8x128xf32, #tpu.memory_space<vmem>>) target_semaphore(%53 : memref<!tpu.dma_semaphore, #tpu.memory_space<semaphore_mem>>)
    } else {
    }
    %c4_i32 = arith.constant 4 : i32
    %24 = arith.muli %arg0, %c4_i32 : i32
    %c4_i32_10 = arith.constant 4 : i32
    %25 = arith.muli %arg2, %c4_i32_10 : i32
    %c0_i32_11 = arith.constant 0 : i32
    %26 = tpu.memref_slice %arg4[%24, %arg1, %25, %6, %c0_i32_11] : memref<4x2x4x16x128xf32, #tpu.memory_space<any>> -> memref<4x1x4x8x128xf32, #tpu.memory_space<any>>
    %27 = tpu.memref_squeeze %26 : memref<4x1x4x8x128xf32, #tpu.memory_space<any>> -> memref<4x4x8x128xf32, #tpu.memory_space<any>>
    %c0_i32_12 = arith.constant 0 : i32
    %c0_i32_13 = arith.constant 0 : i32
    %c8_i32_14 = arith.constant 8 : i32
    %c0_i32_15 = arith.constant 0 : i32
    %28 = tpu.memref_slice %arg6[%16, %c0_i32_12, %c0_i32_13, %c8_i32_14, %c0_i32_15] : memref<2x4x4x16x128xf32, #tpu.memory_space<vmem>> -> memref<1x4x4x8x128xf32, #tpu.memory_space<vmem>>
    %29 = tpu.memref_squeeze %28 : memref<1x4x4x8x128xf32, #tpu.memory_space<vmem>> -> memref<4x4x8x128xf32, #tpu.memory_space<vmem>>
    %30 = tpu.memref_slice %arg7[%16] : memref<2x!tpu.dma_semaphore, #tpu.memory_space<semaphore_mem>> -> memref<1x!tpu.dma_semaphore, #tpu.memory_space<semaphore_mem>>
    %31 = tpu.memref_squeeze %30 : memref<1x!tpu.dma_semaphore, #tpu.memory_space<semaphore_mem>> -> memref<!tpu.dma_semaphore, #tpu.memory_space<semaphore_mem>>
    tpu.wait_dma2 semaphore(%31 : memref<!tpu.dma_semaphore, #tpu.memory_space<semaphore_mem>>) src(%27 : memref<4x4x8x128xf32, #tpu.memory_space<any>>) dst(%29 : memref<4x4x8x128xf32, #tpu.memory_space<vmem>>)
    %32 = arith.index_cast %16 : i32 to index
    %c0 = arith.constant 0 : index
    %c0_16 = arith.constant 0 : index
    %33 = arith.index_cast %4 : i32 to index
    %c0_17 = arith.constant 0 : index
    %34 = vector.load %arg6[%32, %c0, %c0_16, %33, %c0_17] : memref<2x4x4x16x128xf32, #tpu.memory_space<vmem>>, vector<1x4x4x8x128xf32>
    %35 = vector.shape_cast %34 : vector<1x4x4x8x128xf32> to vector<4x4x8x128xf32>
    %36 = tpu.iota {dimensions = array<i32: 2>} : vector<4x4x8x128xi32>
    %37 = vector.broadcast %5 : i32 to vector<4x4x8x128xi32>
    %38 = arith.cmpi sge, %36, %37 : vector<4x4x8x128xi32>
    %cst = arith.constant 0.000000e+00 : f32
    %39 = vector.broadcast %cst : f32 to vector<4x4x8x128xf32>
    %40 = arith.select %38, %35, %39 : vector<4x4x8x128xi1>, vector<4x4x8x128xf32>
    %c0_18 = arith.constant 0 : index
    %c0_19 = arith.constant 0 : index
    %c0_20 = arith.constant 0 : index
    %c0_21 = arith.constant 0 : index
    %c0_22 = arith.constant 0 : index
    %41 = vector.load %arg5[%c0_18, %c0_19, %c0_20, %c0_21, %c0_22] : memref<4x1x4x8x128xf32, #tpu.memory_space<vmem>>, vector<4x1x4x8x128xf32>
    %42 = vector.shape_cast %41 : vector<4x1x4x8x128xf32> to vector<4x4x8x128xf32>
    %43 = vector.shape_cast %40 : vector<4x4x8x128xf32> to vector<4x1x4x8x128xf32>
    tpu.vector_store %arg5[%c0_18, %c0_19, %c0_20, %c0_21, %c0_22], %43 {strides = array<i32>} : memref<4x1x4x8x128xf32, #tpu.memory_space<vmem>>, vector<4x1x4x8x128xf32>,
    return
  }
  func.func @transform_1(%arg0: i32, %arg1: i32, %arg2: i32, %arg3: memref<2xi32, #tpu.memory_space<smem>>) -> (i32, i32, i32, i32, i32) {
    %c0_i32 = arith.constant 0 : i32
    %c0_i32_0 = arith.constant 0 : i32
    %c0_i32_1 = arith.constant 0 : i32
    return %arg0, %arg1, %arg2, %c0_i32, %c0_i32_0 : i32, i32, i32, i32, i32
  }
}

</mosaic_0001>

<llo_original>
// kernel: tpu_custom_call.1
$region0: #{tpu_custom_call.1}
  #allocation0 [shape = 'u32[]', space=smem, size = 0x4, offset = 0x4, fixed_abs, tag = 'smem constant byte address 0x4 - core index']
  #allocation1 [shape = 'u32[144,128]{1,0:T(1,128)}', space=vmem, size = 0x12000, scoped, tag = 'internal scratch']
  #allocation2 [shape = 'f32[2,4,4,16,128]{4,3,2,1,0:T(8,128)}', space=vmem, size = 0x40000, scoped, tag = 'scratch operand']
  #allocation3 [shape = 's32[2]{0}', space=sflag, size = 0x8, scoped, tag = 'scratch operand']
  #allocation4 [shape = 's32[1]{0}', space=sflag, size = 0x4, scoped, tag = 'scoped memory for tpu_custom_call.1']
  #allocation5 [shape = 'u8[512]{0}', space=smem, size = 0x200, scoped, tag = 'prefetched SMEM operand 0']
  #allocation8 [shape = 's32[]', space=sflag, size = 0x4, offset = 0, fixed_abs, tag = 'sflag constant byte address 0x0 - dummy sync flag']
  #allocation10 [shape = 's32[]', space=sflag, size = 0x4, offset = 0, fixed_abs, tag = 'sflag constant byte address 0x0 - dummy sync flag']
  #allocation12 [shape = 's32[]', space=sflag, size = 0x4, offset = 0, fixed_abs, tag = 'sflag constant byte address 0x0 - dummy sync flag']
  %s0 = inlined_call_operand.hbm [shape: s32[2], index: 0, kind: input, shape index: {}]
  %s1 = inlined_call_operand.hbm [shape: f32[4,2,4,16,128], index: 1, kind: input, shape index: {}]
  %s2 = inlined_call_operand.hbm [shape: f32[4,2,4,8,128], index: 2, kind: output, shape index: {}]
  %s3 = sld [smem:[#allocation0]]
  $region33: #{tpu_custom_call.1} parent=0
    _
  %s5 = ssub.s32 1, %s3
  %s6 = scalar_select 0, %s5, %s3
  %8 = dma.hbm_to_smem %s0, 16, [#allocation5], [#allocation4]
  %9 = dma.done [#allocation4], 16
  %10 = sfence
  $region1: #{tpu_custom_call.1} parent=0
    #allocation6 [shape = 'u8[131072]{0}', space=vmem, size = 0x20000, scoped, tag = 'output window, operand 0']
    #allocation7 [shape = 's32[2]{0}', space=sflag, size = 0x8, scoped, tag = 'scoped memory for tpu_custom_call.1']
    %11 = vsyncpa [#allocation7], 0
    %s12 = scalar_lea.sflag [#allocation7], 1
    %13 = vsyncpa %s12, 0
    loop: start=0, step=1, limit=3
    $region2: #{tpu_custom_call.1} parent=1 // loop_pre_header
      _
    $region3: #{tpu_custom_call.1} parent=1 // loop_header
      %s15 = sphi 0, %s19
      %p16 = scmp.ge.s32.totalorder %s15, 3
      %s21 = sphi 0, %s37
      %s22 = sphi 0, %s33
      %s23 = sphi 0, %s29
      %s24 = sphi 0, %s21
      %s25 = sphi 0, %s22
      %s26 = sphi 0, %s23
      %s44 = sphi 0, %s46
      %s47 = sphi 0, %s44
      %s57 = sphi 0, %s47
    $region4: #{tpu_custom_call.1} parent=1 // loop_header_branch
      %18 = sbr.rel (%p16) target = $region8
    $region5: #{tpu_custom_call.1} parent=1 // loop_body
      %s20 = ssub.s32 %s15, 1
      %s27 = sadd.s32 1, %s23
      %p28 = scmp.ge.s32.totalorder %s27, 1
      %s29 = scalar_select %p28, 0, %s27
      %s30 = sadd.s32 1, %s22
      %s31 = scalar_select %p28, %s30, %s22
      %p32 = scmp.ge.s32.totalorder %s31, 2
      %s33 = scalar_select %p32, 0, %s31
      %s34 = sadd.s32 1, %s21
      %s35 = scalar_select %p32, %s34, %s21
      %p36 = scmp.ge.s32.totalorder %s35, 1
      %s37 = scalar_select %p36, 0, %s35
      %s38 = ssub.s32 %s21, %s37
      %s39 = ssub.s32 %s22, %s33
      %s40 = sor.u32 %s38, %s39
      %s41 = ssub.s32 %s23, %s29
      %s42 = sor.u32 %s40, %s41
      %p43 = scmp.eq.s32.totalorder %s42, 0
      %s45 = sadd.s32 %s44, 1
      %s46 = scalar_select %p43, %s44, %s45
      %p48 = pneg %p43
      %p49 = scmp.eq.s32.totalorder %s15, 1
      %p50 = por %p48, %p49
      %p51 = scmp.ne.s32.totalorder %s44, %s47
      %p52 = scmp.eq.s32.totalorder %s15, 0
      %p53 = por %p51, %p52
      %p54 = scmp.ne.s32.totalorder %s44, %s47
      %p55 = scmp.eq.s32.totalorder %s20, 1
      %p56 = por %p54, %p55
      %p58 = scmp.ne.s32.totalorder %s47, %s57
      %p59 = scmp.eq.s32.totalorder %s20, 0
      %p60 = por %p58, %p59
      %p61 = scmp.lt.s32.totalorder %s15, 2
      // Predicated region
      $region9: #{tpu_custom_call.1} parent=5 // pred_check
        %p62 = pneg %p61
      $region10: #{tpu_custom_call.1} parent=5 // pred_check_branch
        %64 = sbr.rel (%p62) target = $region12
      $region11: #{tpu_custom_call.1} parent=5 // pred_region
        %p65 = pneg %p53
        %p66 = pneg %p50
        %s67 = sand.u32 %s44, 1
        %s68 = scalar_lea.sflag [#allocation7], %s67
        %s69 = sand.u32 %s44, 1
        %s70 = smul.addr %s69, 128
        %s71 = scalar_lea.vmem [#allocation6], %s70
        %s72 = smul.u32 4, %s21
        %s73 = smul.u32 4, %s23
        %s74 = sld [smem:[#allocation5 + %s22]]
        %p75 = scmp.gt.s32.totalorder %s74, 0
        %s76 = scalar_select %p75, %s74, 0
        %p77 = scmp.lt.s32.totalorder %s76, 16
        %s78 = scalar_select %p77, %s76, 16
        %p79 = scmp.lt.s32.totalorder %s78, 8
        %s80 = scalar_select %p79, %s78, 8
        %s81 = ssub.s32 8, %s80
        %s82 = ssub.s32 %s78, %s80
        %p83 = scmp.lt.s32.totalorder %s23, 0
        %s84 = ssub.s32 0, %s23
        %s85 = scalar_select %p83, %s84, %s23
        %s86 = sand.u32 %s85, 1
        %s87 = ssub.s32 0, %s86
        %s88 = scalar_select %p83, %s87, %s86
        %p89 = scmp.ne.s32.totalorder %s88, 0
        %p90 = scmp.lt.s32.totalorder %s88, 0
        %p91 = pnand %p90, %p89
        %p92 = pneg %p91
        %s93 = sadd.s32 %s88, 2
        %s94 = scalar_select %p92, %s93, %s88
        %p95 = scmp.eq.s32.totalorder %s23, 0
        // Predicated region
        $region13: #{tpu_custom_call.1} parent=11 // pred_check
          %p96 = pneg %p95
        $region14: #{tpu_custom_call.1} parent=11 // pred_check_branch
          %98 = sbr.rel (%p96) target = $region16
        $region15: #{tpu_custom_call.1} parent=11 // pred_region
          #allocation9 [shape = 'u32[6]{0}', space=smem, size = 0x18, scoped, tag = 'DMA stride descriptor']
          %s99 = smul.u32 %s21, 4
          %s100 = smul.u32 %s22, 64
          %s101 = sadd.s32 %s82, %s100
          %s102 = smul.u32 %s99, 128
          %s103 = sadd.s32 %s101, %s102
          %s104 = smul.addr %s103, 16
          %s105 = scalar_lea.hbm %s1, %s104
          %s106 = scalar_lea.vmem [#allocation2], 8
          %s108 = sshll.u32 1, 14
          %s109 = sxor.u32 4294967295, %s108
          %s111 = sld [smem:[#allocation0]]
          %s112 = sadd.s32 2, %s111
          %s114 = sshll.u32 7, 26
          %s115 = sxor.u32 4294967295, %s114
          %s116 = sand.u32 0, %s115
          %s117 = sshll.u32 %s112, 26
          %s118 = sor.u32 %s116, %s117
          %s119 = sshll.u32 %s106, 4
          %s120 = int_to_ptr.vmem [resolvable:$true] %s119
          %123 = sst [smem:[#allocation9]] 2048
          %s124 = scalar_lea.smem [#allocation9], 1
          %125 = sst [smem:[%s124]] 1024
          %s126 = scalar_lea.smem [#allocation9], 2
          %127 = sst [smem:[%s126]] 4
          %s128 = scalar_lea.smem [#allocation9], 3
          %129 = sst [smem:[%s128]] 256
          %s130 = scalar_lea.smem [#allocation9], 4
          %131 = sst [smem:[%s130]] 256
          %s132 = scalar_lea.smem [#allocation9], 5
          %133 = sst [smem:[%s132]] 8
          %135 = dma.general %s105, 2048, %s120, [#allocation3], [#allocation8], [#allocation9], %s118, 0
        $region16: #{tpu_custom_call.1} parent=11 // pred_fallthru
          _
        %s136 = sadd.s32 %s23, 1
        %p137 = scmp.lt.s32.totalorder %s136, 1
        // Predicated region
        $region17: #{tpu_custom_call.1} parent=11 // pred_check
          %p138 = pneg %p137
        $region18: #{tpu_custom_call.1} parent=11 // pred_check_branch
          %140 = sbr.rel (%p138) target = $region20
        $region19: #{tpu_custom_call.1} parent=11 // pred_region
          #allocation11 [shape = 'u32[6]{0}', space=smem, size = 0x18, scoped, tag = 'DMA stride descriptor']
          %s141 = ssub.s32 1, %s94
          %s142 = smul.u32 %s21, 4
          %s143 = smul.u32 %s136, 4
          %s144 = smul.u32 %s143, 16
          %s145 = sadd.s32 %s82, %s144
          %s146 = smul.u32 %s22, 64
          %s147 = sadd.s32 %s145, %s146
          %s148 = smul.u32 %s142, 128
          %s149 = sadd.s32 %s147, %s148
          %s150 = smul.addr %s149, 16
          %s151 = scalar_lea.hbm %s1, %s150
          %s152 = smul.u32 %s141, 256
          %s153 = sadd.s32 8, %s152
          %s154 = scalar_lea.vmem [#allocation2], %s153
          %s155 = scalar_lea.sflag [#allocation3], %s141
          %s157 = sshll.u32 1, 14
          %s158 = sxor.u32 4294967295, %s157
          %s160 = sld [smem:[#allocation0]]
          %s161 = sadd.s32 2, %s160
          %s163 = sshll.u32 7, 26
          %s164 = sxor.u32 4294967295, %s163
          %s165 = sand.u32 0, %s164
          %s166 = sshll.u32 %s161, 26
          %s167 = sor.u32 %s165, %s166
          %s168 = sshll.u32 %s154, 4
          %s169 = int_to_ptr.vmem [resolvable:$true] %s168
          %172 = sst [smem:[#allocation11]] 2048
          %s173 = scalar_lea.smem [#allocation11], 1
          %174 = sst [smem:[%s173]] 1024
          %s175 = scalar_lea.smem [#allocation11], 2
          %176 = sst [smem:[%s175]] 4
          %s177 = scalar_lea.smem [#allocation11], 3
          %178 = sst [smem:[%s177]] 256
          %s179 = scalar_lea.smem [#allocation11], 4
          %180 = sst [smem:[%s179]] 256
          %s181 = scalar_lea.smem [#allocation11], 5
          %182 = sst [smem:[%s181]] 8
          %184 = dma.general %s151, 2048, %s169, %s155, [#allocation10], [#allocation11], %s167, 0
        $region20: #{tpu_custom_call.1} parent=11 // pred_fallthru
          _
        %s185 = scalar_lea.sflag [#allocation3], %s94
        %s186 = smul.u32 4, 4
        %s187 = smul.u32 %s186, 8
        %s188 = smul.u32 %s187, 1
        %s189 = sshll.u32 %s188, 4
        %190 = dma.done %s185, %s189
        %s191 = smul.u32 %s94, 256
        %s192 = sadd.s32 %s80, %s191
        %s193 = scalar_lea.vmem [#allocation2], %s192
        %v194 = vld [vmem:[%s193] sm:$0xff]
        %v195 = vld [vmem:[%s193 + $0x10] sm:$0xff]
        %v196 = vld [vmem:[%s193 + $0x20] sm:$0xff]
        %v197 = vld [vmem:[%s193 + $0x30] sm:$0xff]
        %v198 = vld [vmem:[%s193 + $0x40] sm:$0xff]
        %v199 = vld [vmem:[%s193 + $0x50] sm:$0xff]
        %v200 = vld [vmem:[%s193 + $0x60] sm:$0xff]
        %v201 = vld [vmem:[%s193 + $0x70] sm:$0xff]
        %v202 = vld [vmem:[%s193 + $0x80] sm:$0xff]
        %v203 = vld [vmem:[%s193 + $0x90] sm:$0xff]
        %v204 = vld [vmem:[%s193 + $0xa0] sm:$0xff]
        %v205 = vld [vmem:[%s193 + $0xb0] sm:$0xff]
        %v206 = vld [vmem:[%s193 + $0xc0] sm:$0xff]
        %v207 = vld [vmem:[%s193 + $0xd0] sm:$0xff]
        %v208 = vld [vmem:[%s193 + $0xe0] sm:$0xff]
        %v209 = vld [vmem:[%s193 + $0xf0] sm:$0xff]
        %v210 = vlaneseq
        %v211 = vshrl.u32 %v210, 7
        %v212 = vstv %s81
        %vm213 = vcmp.ge.s32.totalorder %v211, %v212
        %v214 = vsel %vm213, %v194, 0.0
        %v215 = vsel %vm213, %v195, 0.0
        %v216 = vsel %vm213, %v196, 0.0
        %v217 = vsel %vm213, %v197, 0.0
        %v218 = vsel %vm213, %v198, 0.0
        %v219 = vsel %vm213, %v199, 0.0
        %v220 = vsel %vm213, %v200, 0.0
        %v221 = vsel %vm213, %v201, 0.0
        %v222 = vsel %vm213, %v202, 0.0
        %v223 = vsel %vm213, %v203, 0.0
        %v224 = vsel %vm213, %v204, 0.0
        %v225 = vsel %vm213, %v205, 0.0
        %v226 = vsel %vm213, %v206, 0.0
        %v227 = vsel %vm213, %v207, 0.0
        %v228 = vsel %vm213, %v208, 0.0
        %v229 = vsel %vm213, %v209, 0.0
        %230 = vst [vmem:[%s71] sm:$0xff] %v214
        %231 = vst [vmem:[%s71 + $0x8] sm:$0xff] %v215
        %232 = vst [vmem:[%s71 + $0x10] sm:$0xff] %v216
        %233 = vst [vmem:[%s71 + $0x18] sm:$0xff] %v217
        %234 = vst [vmem:[%s71 + $0x20] sm:$0xff] %v218
        %235 = vst [vmem:[%s71 + $0x28] sm:$0xff] %v219
        %236 = vst [vmem:[%s71 + $0x30] sm:$0xff] %v220
        %237 = vst [vmem:[%s71 + $0x38] sm:$0xff] %v221
        %238 = vst [vmem:[%s71 + $0x40] sm:$0xff] %v222
        %239 = vst [vmem:[%s71 + $0x48] sm:$0xff] %v223
        %240 = vst [vmem:[%s71 + $0x50] sm:$0xff] %v224
        %241 = vst [vmem:[%s71 + $0x58] sm:$0xff] %v225
        %242 = vst [vmem:[%s71 + $0x60] sm:$0xff] %v226
        %243 = vst [vmem:[%s71 + $0x68] sm:$0xff] %v227
        %244 = vst [vmem:[%s71 + $0x70] sm:$0xff] %v228
        %245 = vst [vmem:[%s71 + $0x78] sm:$0xff] %v229
        %s246 = sand.u32 %s44, 1
        %s247 = scalar_lea.sflag [#allocation7], %s246
        %s248 = sand.u32 %s44, 1
        %s249 = smul.addr %s248, 128
        %s250 = scalar_lea.vmem [#allocation6], %s249
        // Predicated region
        $region21: #{tpu_custom_call.1} parent=11 // pred_check
          %p251 = pneg %p50
        $region22: #{tpu_custom_call.1} parent=11 // pred_check_branch
          %253 = sbr.rel (%p251) target = $region24
        $region23: #{tpu_custom_call.1} parent=11 // pred_region
          #allocation13 [shape = 'u32[6]{0}', space=smem, size = 0x18, scoped, tag = 'DMA stride descriptor']
          %s254 = smul.u32 4, %s21
          %s255 = smul.u32 4, %s23
          %s257 = ssub.s32 2048, 2048
          %258 = vsyncadd %s247, %s257
          %s259 = smul.addr %s22, 4
          %s260 = sadd.s32 %s255, %s259
          %s261 = smul.addr %s254, 8
          %s262 = sadd.s32 %s260, %s261
          %s263 = smul.addr %s262, 128
          %s264 = scalar_lea.hbm %s2, %s263
          %s266 = sshll.u32 1, 14
          %s267 = sxor.u32 4294967295, %s266
          %s270 = sshll.u32 7, 18
          %s271 = sxor.u32 4294967295, %s270
          %s272 = sand.u32 0, %s271
          %s274 = sor.u32 %s272, 0
          %s276 = sshll.u32 3, 24
          %s277 = sxor.u32 4294967295, %s276
          %s278 = sand.u32 %s274, %s277
          %s280 = sor.u32 %s278, 0
          %s281 = sshll.u32 %s250, 4
          %s282 = int_to_ptr.vmem [resolvable:$true] %s281
          %288 = sst [smem:[#allocation13]] 512
          %s289 = scalar_lea.smem [#allocation13], 1
          %290 = sst [smem:[%s289]] 1024
          %s291 = scalar_lea.smem [#allocation13], 2
          %292 = sst [smem:[%s291]] 4
          %s293 = scalar_lea.smem [#allocation13], 3
          %294 = sst [smem:[%s293]] 128
          %s295 = scalar_lea.smem [#allocation13], 4
          %296 = sst [smem:[%s295]] 128
          %s297 = scalar_lea.smem [#allocation13], 5
          %298 = sst [smem:[%s297]] 8
          %300 = dma.general %s282, 2048, %s264, %s247, [#allocation12], [#allocation13], %s280, 0
        $region24: #{tpu_custom_call.1} parent=11 // pred_fallthru
          _
      $region12: #{tpu_custom_call.1} parent=5 // pred_fallthru
        _
      %p301 = scmp.le.s32.totalorder 1, %s15
      // Predicated region
      $region25: #{tpu_custom_call.1} parent=5 // pred_check
        %p302 = pneg %p301
      $region26: #{tpu_custom_call.1} parent=5 // pred_check_branch
        %304 = sbr.rel (%p302) target = $region28
      $region27: #{tpu_custom_call.1} parent=5 // pred_region
        %s305 = ssub.s32 %s15, 1
        // Predicated region
        $region29: #{tpu_custom_call.1} parent=27 // pred_check
          %p306 = pneg %p56
        $region30: #{tpu_custom_call.1} parent=27 // pred_check_branch
          %308 = sbr.rel (%p306) target = $region32
        $region31: #{tpu_custom_call.1} parent=27 // pred_region
          %s309 = sand.u32 %s47, 1
          %s310 = scalar_lea.sflag [#allocation7], %s309
          %s311 = sand.u32 %s47, 1
          %s312 = smul.addr %s311, 128
          %s313 = scalar_lea.vmem [#allocation6], %s312
          %314 = dma.done %s310, 2048
        $region32: #{tpu_custom_call.1} parent=27 // pred_fallthru
          _
      $region28: #{tpu_custom_call.1} parent=5 // pred_fallthru
        _
    $region6: #{tpu_custom_call.1} parent=1 // loop_footer
      %s19 = sadd.s32 1, %s15
    $region7: #{tpu_custom_call.1} parent=1 // loop_footer_branch
      %14 = sbr.rel target = $region3
    $region8: #{tpu_custom_call.1} parent=1 // loop_exit
      _
    %315 = vsyncpa [#allocation7], 1
    %s316 = scalar_lea.sflag [#allocation7], 1
    %317 = vsyncpa %s316, 1
  %318 = vsyncmov [#allocation3]
  %s319 = vpop.sfrf %318
  %p320 = scmp.eq.s32.totalorder %s319, 0
  %p321 = pneg %p320
  %323 = shalt.err (%p321)
  %s324 = scalar_lea.sflag [#allocation3], 1
  %325 = vsyncmov %s324
  %s326 = vpop.sfrf %325
  %p327 = scmp.eq.s32.totalorder %s326, 0
  %p328 = pneg %p327
  %330 = shalt.err (%p328)

</llo_original>
